<compile_context>
chip_gen: v7x
topology: tpu7x:2x2x1
jax: 0.10.0
libtpu: 0.0.40
codegen_flags: <defaults>
</compile_context>

<pallas_src>
import functools

import jax
import jax.numpy as jnp
from jax import lax
from jax.experimental import pallas as pl
from jax.experimental.pallas import tpu as pltpu


def _floordiv_const(x, d):
    """x // d for a static positive int d; uses a shift when d is a power of
    two (cheap and always supported on the VPU)."""
    if d == 1:
        return x
    if (d & (d - 1)) == 0:
        return x >> (d.bit_length() - 1)
    # TODO(synk): non-power-of-two divisor falls back to vector integer div.
    return x // d


def _cgr_kernel(x_ref, w_ref, b_ref, g_ref, beta_ref, o_ref, p_ref, *,
                K, pad, H, W, Cpg, eps):
    """Fused conv(stride=1, 'same') + GroupNorm + ReLU for one batch element.

    x_ref    : (1, Cin, H*W)     CHW-flat input tile (VMEM)
    w_ref    : (Cout, K*K*Cin)   im2col-flattened conv weight
    b_ref    : (Cout, 1)         conv bias
    g_ref    : (Cout, 1)         GroupNorm gamma
    beta_ref : (Cout, 1)         GroupNorm beta
    o_ref    : (1, Cout, H*W)    CHW-flat output tile (lane-dense minor dim)
    p_ref    : (K*K*Cin, H*W)    VMEM scratch: transposed im2col patch matrix
    """
    Cin = x_ref.shape[1]
    Cout = w_ref.shape[0]
    HW = H * W

    x = x_ref[0]                                          # (Cin, HW)

    # Hoisted lane-position decomposition (iota/broadcasts are not CSE'd).
    lane = lax.broadcasted_iota(jnp.int32, (Cin, HW), 1)
    ho = _floordiv_const(lane, W)                         # output row index
    wo = lane - ho * W                                    # output col index

    # --- Transposed im2col: each tap writes a lane-dense (Cin, HW) slab. ---
    # p[(kh*K + kw)*Cin + ci, ho*W + wo] = x_padded[ci, ho + kh - pad, wo + kw - pad]
    for kh in range(K):
        dh = kh - pad
        for kw in range(K):
            dw = kw - pad
            t = kh * K + kw
            s = dh * W + dw                               # flat source offset
            # want slab[q] = x[q + s]  ->  roll by -s (cyclic; border masked).
            slab = pltpu.roll(x, shift=(-s) % HW, axis=1) if (s % HW) else x
            conds = []
            if dh < 0:
                conds.append(ho >= -dh)
            if dh > 0:
                conds.append(ho < H - dh)
            if dw < 0:
                conds.append(wo >= -dw)
            if dw > 0:
                conds.append(wo < W - dw)
            if conds:
                valid = functools.reduce(lambda a, b: a & b, conds)
                slab = jnp.where(valid, slab, jnp.zeros_like(slab))
            p_ref[t * Cin:(t + 1) * Cin, :] = slab.astype(p_ref.dtype)

    # --- Conv as ONE NN MXU matmul; result is lane-dense (Cout, HW). ---
    acc = jnp.dot(w_ref[...], p_ref[...], preferred_element_type=jnp.float32)
    acc = acc + b_ref[...]                                # conv bias

    # --- GroupNorm, reduce-first: (Cout,1) stats, then group-average them. ---
    ci = lax.broadcasted_iota(jnp.int32, (Cout, Cout), 0)
    cj = lax.broadcasted_iota(jnp.int32, (Cout, Cout), 1)
    same_group = _floordiv_const(ci, Cpg) == _floordiv_const(cj, Cpg)
    gavg = jnp.where(same_group, 1.0 / Cpg, 0.0)          # rows sum to 1

    def group_avg(v):                                     # (Cout,1) -> (Cout,1)
        # Broadcast to a lane-dense RHS so the tiny matmul keeps native shape.
        vb = jnp.broadcast_to(v, (Cout, 128))
        return jnp.dot(gavg, vb, preferred_element_type=jnp.float32)[:, 0:1]

    rowmean = jnp.mean(acc, axis=1, keepdims=True)        # (Cout, 1)
    gmean = group_avg(rowmean)                            # per-(sample, group) mean
    d = acc - gmean
    rowvar = jnp.mean(d * d, axis=1, keepdims=True)       # (Cout, 1)
    gvar = group_avg(rowvar)                              # per-(sample, group) var

    # --- Fold the GN affine into one FMA, then ReLU, full-lane store. ---
    scale = g_ref[...] * lax.rsqrt(gvar + eps)            # (Cout, 1)
    shift = beta_ref[...] - gmean * scale                 # (Cout, 1)
    o_ref[0] = jnp.maximum(acc * scale + shift, 0.0).astype(o_ref.dtype)


@functools.partial(jax.jit,
                   static_argnames=("stride", "padding", "num_groups", "eps"))
def cgr_forward(x_nchw, weight_oihw, bias, gamma, beta, *,
                stride=1, padding=None, num_groups=32, eps=1e-5):
    """CGR.forward: relu(group_norm(conv2d(x, W, b), num_groups, gamma, beta))."""
    Cout, Cin, K, _ = weight_oihw.shape
    if padding is None:
        padding = (K - 1) // 2
    if stride != 1:
        # TODO(synk): stride != 1 needs a strided output gather; stride=1 only.
        raise NotImplementedError("stride != 1 not supported in this kernel")
    if Cout % num_groups != 0:
        raise ValueError("out_channel must be divisible by num_groups")
    Cpg = Cout // num_groups

    N, Cin_x, H, W = x_nchw.shape
    assert Cin_x == Cin
    Ho = H + 2 * padding - K + 1
    Wo = W + 2 * padding - K + 1
    if (Ho, Wo) != (H, W):
        # TODO(synk): the roll-based im2col assumes 'same' spatial output
        # (2*padding == K-1); other paddings need a padded-scratch path.
        raise NotImplementedError("only 'same' padding (2*pad == K-1) supported")
    HW = H * W

    # Wrapper-side glue: free reshapes only (no NHWC transpose HBM round trip).
    x_flat = x_nchw.reshape(N, Cin, HW)
    # im2col-flattened weight: w2[co, (kh*K + kw)*Cin + ci] = W[co, ci, kh, kw]
    w2 = (jnp.transpose(weight_oihw, (0, 2, 3, 1))
          .reshape(Cout, K * K * Cin).astype(jnp.float32))
    b2 = bias.reshape(Cout, 1).astype(jnp.float32)
    g2 = gamma.reshape(Cout, 1).astype(jnp.float32)
    beta2 = beta.reshape(Cout, 1).astype(jnp.float32)

    kernel = functools.partial(_cgr_kernel, K=K, pad=padding, H=H, W=W,
                               Cpg=Cpg, eps=float(eps))

    out_flat = pl.pallas_call(
        kernel,
        out_shape=jax.ShapeDtypeStruct((N, Cout, HW), x_nchw.dtype),
        grid_spec=pltpu.PrefetchScalarGridSpec(
            num_scalar_prefetch=0,
            grid=(N,),
            in_specs=[
                pl.BlockSpec((1, Cin, HW), lambda n: (n, 0, 0)),
                pl.BlockSpec((Cout, K * K * Cin), lambda n: (0, 0)),
                pl.BlockSpec((Cout, 1), lambda n: (0, 0)),
                pl.BlockSpec((Cout, 1), lambda n: (0, 0)),
                pl.BlockSpec((Cout, 1), lambda n: (0, 0)),
            ],
            out_specs=pl.BlockSpec((1, Cout, HW), lambda n: (n, 0, 0)),
            scratch_shapes=[pltpu.VMEM((K * K * Cin, HW), jnp.float32)],
        ),
        compiler_params=pltpu.CompilerParams(
            dimension_semantics=("parallel",)),
    )(x_flat, w2, b2, g2, beta2)

    # Output is already CHW-flat: a free reshape (no transpose) finishes it.
    return out_flat.reshape(N, Cout, Ho, Wo)


def _reference(x_nchw, weight_oihw, bias, gamma, beta, *, padding,
               num_groups=32, eps=1e-5):
    y = lax.conv_general_dilated(
        x_nchw.astype(jnp.float32), weight_oihw.astype(jnp.float32),
        window_strides=(1, 1),
        padding=[(padding, padding), (padding, padding)],
        dimension_numbers=("NCHW", "OIHW", "NCHW"))
    y = y + bias.reshape(1, -1, 1, 1)
    N, C, H, W = y.shape
    yg = y.reshape(N, num_groups, C // num_groups, H, W)
    mean = yg.mean(axis=(2, 3, 4), keepdims=True)
    var = ((yg - mean) ** 2).mean(axis=(2, 3, 4), keepdims=True)
    yn = ((yg - mean) / jnp.sqrt(var + eps)).reshape(N, C, H, W)
    yn = yn * gamma.reshape(1, -1, 1, 1) + beta.reshape(1, -1, 1, 1)
    return jnp.maximum(yn, 0.0)


if __name__ == "__main__":
    # CGR(in_channel=4, out_channel=64, kernel_size=3): GroupNorm(32, C) needs
    # out_channel % 32 == 0, so 64 is the smallest non-degenerate choice.
    N, Cin, H, W = 2, 4, 16, 16
    Cout, K = 64, 3
    padding = (K - 1) // 2

    key = jax.random.PRNGKey(0)
    kx, kw, kb, kg, kbt = jax.random.split(key, 5)
    x = jax.random.normal(kx, (N, Cin, H, W), jnp.float32)
    weight = jax.random.normal(kw, (Cout, Cin, K, K), jnp.float32) * 0.1
    bias = jax.random.normal(kb, (Cout,), jnp.float32) * 0.1
    gamma = 1.0 + 0.1 * jax.random.normal(kg, (Cout,), jnp.float32)
    beta = 0.1 * jax.random.normal(kbt, (Cout,), jnp.float32)

    out = cgr_forward(x, weight, bias, gamma, beta, stride=1, padding=padding)
    out = jax.block_until_ready(out)

    ref = _reference(x, weight, bias, gamma, beta, padding=padding)
    assert out.shape == (N, Cout, H, W), out.shape
    max_err = float(jnp.max(jnp.abs(out - ref)))
    assert jnp.allclose(out, ref, atol=1e-3, rtol=1e-3), max_err

    print("KERNEL_OK")
</pallas_src>

<mosaic_0001>
module attributes {stable_mosaic.version = 11 : i64} {
  func.func @_cgr_kernel(%arg0: i32, %arg1: memref<1x4x256xf32, #tpu.memory_space<vmem>>, %arg2: memref<64x36xf32, #tpu.memory_space<vmem>>, %arg3: memref<64x1xf32, #tpu.memory_space<vmem>>, %arg4: memref<64x1xf32, #tpu.memory_space<vmem>>, %arg5: memref<64x1xf32, #tpu.memory_space<vmem>>, %arg6: memref<1x64x256xf32, #tpu.memory_space<vmem>>, %arg7: memref<36x256xf32, #tpu.memory_space<vmem>>) attributes {dimension_semantics = [#tpu.dimension_semantics<parallel>], iteration_bounds = array<i64: 2>, scalar_prefetch = 0 : i64, scratch_operands = 1 : i64, tpu.core_type = #tpu.core_type<tc>, window_params = [{transform_indices = @transform_0, window_bounds = array<i64: 1, 4, 256>}, {pipeline_mode = #tpu.pipeline_mode<synchronous>, transform_indices = @transform_1, window_bounds = array<i64: 64, 36>}, {pipeline_mode = #tpu.pipeline_mode<synchronous>, transform_indices = @transform_2, window_bounds = array<i64: 64, 1>}, {pipeline_mode = #tpu.pipeline_mode<synchronous>, transform_indices = @transform_3, window_bounds = array<i64: 64, 1>}, {pipeline_mode = #tpu.pipeline_mode<synchronous>, transform_indices = @transform_4, window_bounds = array<i64: 64, 1>}, {transform_indices = @transform_5, window_bounds = array<i64: 1, 64, 256>}]} {
    %c0 = arith.constant 0 : index
    %c0_0 = arith.constant 0 : index
    %c0_1 = arith.constant 0 : index
    %0 = vector.load %arg1[%c0, %c0_0, %c0_1] : memref<1x4x256xf32, #tpu.memory_space<vmem>>, vector<1x4x256xf32>
    %1 = vector.shape_cast %0 : vector<1x4x256xf32> to vector<4x256xf32>
    %2 = tpu.iota {dimensions = array<i32: 1>} : vector<4x256xi32>
    %c4_i32 = arith.constant 4 : i32
    %3 = vector.broadcast %c4_i32 : i32 to vector<4x256xi32>
    %4 = arith.shrsi %2, %3 : vector<4x256xi32>
    %c16_i32 = arith.constant 16 : i32
    %5 = vector.broadcast %c16_i32 : i32 to vector<4x256xi32>
    %6 = arith.muli %4, %5 : vector<4x256xi32>
    %7 = arith.subi %2, %6 : vector<4x256xi32>
    %c17_i32 = arith.constant 17 : i32
    %8 = tpu.dynamic_rotate %1 by %c17_i32 dim 1 : vector<4x256xf32>, i32 -> vector<4x256xf32>
    %c1_i32 = arith.constant 1 : i32
    %9 = vector.broadcast %c1_i32 : i32 to vector<4x256xi32>
    %10 = arith.cmpi sge, %4, %9 : vector<4x256xi32>
    %c1_i32_2 = arith.constant 1 : i32
    %11 = vector.broadcast %c1_i32_2 : i32 to vector<4x256xi32>
    %12 = arith.cmpi sge, %7, %11 : vector<4x256xi32>
    %13 = arith.andi %10, %12 : vector<4x256xi1>
    %cst = arith.constant 0.000000e+00 : f32
    %14 = vector.broadcast %cst : f32 to vector<4x256xf32>
    %15 = arith.select %13, %8, %14 : vector<4x256xi1>, vector<4x256xf32>
    %c0_3 = arith.constant 0 : index
    %c0_4 = arith.constant 0 : index
    %16 = vector.load %arg7[%c0_3, %c0_4] : memref<36x256xf32, #tpu.memory_space<vmem>>, vector<4x256xf32>
    tpu.vector_store %arg7[%c0_3, %c0_4], %15 {strides = array<i32>} : memref<36x256xf32, #tpu.memory_space<vmem>>, vector<4x256xf32>,
    %c16_i32_5 = arith.constant 16 : i32
    %17 = tpu.dynamic_rotate %1 by %c16_i32_5 dim 1 : vector<4x256xf32>, i32 -> vector<4x256xf32>
    %c1_i32_6 = arith.constant 1 : i32
    %18 = vector.broadcast %c1_i32_6 : i32 to vector<4x256xi32>
    %19 = arith.cmpi sge, %4, %18 : vector<4x256xi32>
    %cst_7 = arith.constant 0.000000e+00 : f32
    %20 = vector.broadcast %cst_7 : f32 to vector<4x256xf32>
    %21 = arith.select %19, %17, %20 : vector<4x256xi1>, vector<4x256xf32>
    %c4 = arith.constant 4 : index
    %c0_8 = arith.constant 0 : index
    %22 = vector.load %arg7[%c4, %c0_8] : memref<36x256xf32, #tpu.memory_space<vmem>>, vector<4x256xf32>
    tpu.vector_store %arg7[%c4, %c0_8], %21 {strides = array<i32>} : memref<36x256xf32, #tpu.memory_space<vmem>>, vector<4x256xf32>,
    %c15_i32 = arith.constant 15 : i32
    %23 = tpu.dynamic_rotate %1 by %c15_i32 dim 1 : vector<4x256xf32>, i32 -> vector<4x256xf32>
    %c1_i32_9 = arith.constant 1 : i32
    %24 = vector.broadcast %c1_i32_9 : i32 to vector<4x256xi32>
    %25 = arith.cmpi sge, %4, %24 : vector<4x256xi32>
    %c15_i32_10 = arith.constant 15 : i32
    %26 = vector.broadcast %c15_i32_10 : i32 to vector<4x256xi32>
    %27 = arith.cmpi slt, %7, %26 : vector<4x256xi32>
    %28 = arith.andi %25, %27 : vector<4x256xi1>
    %cst_11 = arith.constant 0.000000e+00 : f32
    %29 = vector.broadcast %cst_11 : f32 to vector<4x256xf32>
    %30 = arith.select %28, %23, %29 : vector<4x256xi1>, vector<4x256xf32>
    %c8 = arith.constant 8 : index
    %c0_12 = arith.constant 0 : index
    %31 = vector.load %arg7[%c8, %c0_12] : memref<36x256xf32, #tpu.memory_space<vmem>>, vector<4x256xf32>
    tpu.vector_store %arg7[%c8, %c0_12], %30 {strides = array<i32>} : memref<36x256xf32, #tpu.memory_space<vmem>>, vector<4x256xf32>,
    %c1_i32_13 = arith.constant 1 : i32
    %32 = tpu.dynamic_rotate %1 by %c1_i32_13 dim 1 : vector<4x256xf32>, i32 -> vector<4x256xf32>
    %c1_i32_14 = arith.constant 1 : i32
    %33 = vector.broadcast %c1_i32_14 : i32 to vector<4x256xi32>
    %34 = arith.cmpi sge, %7, %33 : vector<4x256xi32>
    %cst_15 = arith.constant 0.000000e+00 : f32
    %35 = vector.broadcast %cst_15 : f32 to vector<4x256xf32>
    %36 = arith.select %34, %32, %35 : vector<4x256xi1>, vector<4x256xf32>
    %c12 = arith.constant 12 : index
    %c0_16 = arith.constant 0 : index
    %37 = vector.load %arg7[%c12, %c0_16] : memref<36x256xf32, #tpu.memory_space<vmem>>, vector<4x256xf32>
    tpu.vector_store %arg7[%c12, %c0_16], %36 {strides = array<i32>} : memref<36x256xf32, #tpu.memory_space<vmem>>, vector<4x256xf32>,
    %c16 = arith.constant 16 : index
    %c0_17 = arith.constant 0 : index
    %38 = vector.load %arg7[%c16, %c0_17] : memref<36x256xf32, #tpu.memory_space<vmem>>, vector<4x256xf32>
    tpu.vector_store %arg7[%c16, %c0_17], %1 {strides = array<i32>} : memref<36x256xf32, #tpu.memory_space<vmem>>, vector<4x256xf32>,
    %c255_i32 = arith.constant 255 : i32
    %39 = tpu.dynamic_rotate %1 by %c255_i32 dim 1 : vector<4x256xf32>, i32 -> vector<4x256xf32>
    %c15_i32_18 = arith.constant 15 : i32
    %40 = vector.broadcast %c15_i32_18 : i32 to vector<4x256xi32>
    %41 = arith.cmpi slt, %7, %40 : vector<4x256xi32>
    %cst_19 = arith.constant 0.000000e+00 : f32
    %42 = vector.broadcast %cst_19 : f32 to vector<4x256xf32>
    %43 = arith.select %41, %39, %42 : vector<4x256xi1>, vector<4x256xf32>
    %c20 = arith.constant 20 : index
    %c0_20 = arith.constant 0 : index
    %44 = vector.load %arg7[%c20, %c0_20] : memref<36x256xf32, #tpu.memory_space<vmem>>, vector<4x256xf32>
    tpu.vector_store %arg7[%c20, %c0_20], %43 {strides = array<i32>} : memref<36x256xf32, #tpu.memory_space<vmem>>, vector<4x256xf32>,
    %c241_i32 = arith.constant 241 : i32
    %45 = tpu.dynamic_rotate %1 by %c241_i32 dim 1 : vector<4x256xf32>, i32 -> vector<4x256xf32>
    %c15_i32_21 = arith.constant 15 : i32
    %46 = vector.broadcast %c15_i32_21 : i32 to vector<4x256xi32>
    %47 = arith.cmpi slt, %4, %46 : vector<4x256xi32>
    %c1_i32_22 = arith.constant 1 : i32
    %48 = vector.broadcast %c1_i32_22 : i32 to vector<4x256xi32>
    %49 = arith.cmpi sge, %7, %48 : vector<4x256xi32>
    %50 = arith.andi %47, %49 : vector<4x256xi1>
    %cst_23 = arith.constant 0.000000e+00 : f32
    %51 = vector.broadcast %cst_23 : f32 to vector<4x256xf32>
    %52 = arith.select %50, %45, %51 : vector<4x256xi1>, vector<4x256xf32>
    %c24 = arith.constant 24 : index
    %c0_24 = arith.constant 0 : index
    %53 = vector.load %arg7[%c24, %c0_24] : memref<36x256xf32, #tpu.memory_space<vmem>>, vector<4x256xf32>
    tpu.vector_store %arg7[%c24, %c0_24], %52 {strides = array<i32>} : memref<36x256xf32, #tpu.memory_space<vmem>>, vector<4x256xf32>,
    %c240_i32 = arith.constant 240 : i32
    %54 = tpu.dynamic_rotate %1 by %c240_i32 dim 1 : vector<4x256xf32>, i32 -> vector<4x256xf32>
    %c15_i32_25 = arith.constant 15 : i32
    %55 = vector.broadcast %c15_i32_25 : i32 to vector<4x256xi32>
    %56 = arith.cmpi slt, %4, %55 : vector<4x256xi32>
    %cst_26 = arith.constant 0.000000e+00 : f32
    %57 = vector.broadcast %cst_26 : f32 to vector<4x256xf32>
    %58 = arith.select %56, %54, %57 : vector<4x256xi1>, vector<4x256xf32>
    %c28 = arith.constant 28 : index
    %c0_27 = arith.constant 0 : index
    %59 = vector.load %arg7[%c28, %c0_27] : memref<36x256xf32, #tpu.memory_space<vmem>>, vector<4x256xf32>
    tpu.vector_store %arg7[%c28, %c0_27], %58 {strides = array<i32>} : memref<36x256xf32, #tpu.memory_space<vmem>>, vector<4x256xf32>,
    %c239_i32 = arith.constant 239 : i32
    %60 = tpu.dynamic_rotate %1 by %c239_i32 dim 1 : vector<4x256xf32>, i32 -> vector<4x256xf32>
    %c15_i32_28 = arith.constant 15 : i32
    %61 = vector.broadcast %c15_i32_28 : i32 to vector<4x256xi32>
    %62 = arith.cmpi slt, %4, %61 : vector<4x256xi32>
    %c15_i32_29 = arith.constant 15 : i32
    %63 = vector.broadcast %c15_i32_29 : i32 to vector<4x256xi32>
    %64 = arith.cmpi slt, %7, %63 : vector<4x256xi32>
    %65 = arith.andi %62, %64 : vector<4x256xi1>
    %cst_30 = arith.constant 0.000000e+00 : f32
    %66 = vector.broadcast %cst_30 : f32 to vector<4x256xf32>
    %67 = arith.select %65, %60, %66 : vector<4x256xi1>, vector<4x256xf32>
    %c32 = arith.constant 32 : index
    %c0_31 = arith.constant 0 : index
    %68 = vector.load %arg7[%c32, %c0_31] : memref<36x256xf32, #tpu.memory_space<vmem>>, vector<4x256xf32>
    tpu.vector_store %arg7[%c32, %c0_31], %67 {strides = array<i32>} : memref<36x256xf32, #tpu.memory_space<vmem>>, vector<4x256xf32>,
    %c0_32 = arith.constant 0 : index
    %c0_33 = arith.constant 0 : index
    %69 = vector.load %arg2[%c0_32, %c0_33] : memref<64x36xf32, #tpu.memory_space<vmem>>, vector<64x36xf32>
    %c0_34 = arith.constant 0 : index
    %c0_35 = arith.constant 0 : index
    %70 = vector.load %arg7[%c0_34, %c0_35] : memref<36x256xf32, #tpu.memory_space<vmem>>, vector<36x256xf32>
    %cst_36 = arith.constant dense<0.000000e+00> : vector<64x256xf32>
    %71 = tpu.matmul %69, %70, %cst_36 {dimension_numbers = #tpu.dot_dimension_numbers<[1], [0], [0], [1], [0, 0, 1, 1], [], []>} : vector<64x36xf32>, vector<36x256xf32>, vector<64x256xf32> -> vector<64x256xf32>
    %c0_37 = arith.constant 0 : index
    %c0_38 = arith.constant 0 : index
    %72 = vector.load %arg3[%c0_37, %c0_38] : memref<64x1xf32, #tpu.memory_space<vmem>>, vector<64x1xf32>
    %73 = vector.broadcast %72 : vector<64x1xf32> to vector<64x256xf32>
    %74 = arith.addf %71, %73 : vector<64x256xf32>
    %75 = tpu.iota {dimensions = array<i32: 0>} : vector<64x64xi32>
    %76 = tpu.iota {dimensions = array<i32: 1>} : vector<64x64xi32>
    %c1_i32_39 = arith.constant 1 : i32
    %77 = vector.broadcast %c1_i32_39 : i32 to vector<64x64xi32>
    %78 = arith.shrsi %75, %77 : vector<64x64xi32>
    %c1_i32_40 = arith.constant 1 : i32
    %79 = vector.broadcast %c1_i32_40 : i32 to vector<64x64xi32>
    %80 = arith.shrsi %76, %79 : vector<64x64xi32>
    %81 = arith.cmpi eq, %78, %80 : vector<64x64xi32>
    %cst_41 = arith.constant 5.000000e-01 : f32
    %cst_42 = arith.constant 0.000000e+00 : f32
    %82 = vector.broadcast %cst_41 : f32 to vector<64x64xf32>
    %83 = vector.broadcast %cst_42 : f32 to vector<64x64xf32>
    %84 = arith.select %81, %82, %83 : vector<64x64xi1>, vector<64x64xf32>
    %cst_43 = arith.constant dense<0.000000e+00> : vector<64xf32>
    %85 = vector.multi_reduction <add>, %74, %cst_43 [1] : vector<64x256xf32> to vector<64xf32>
    %86 = vector.shape_cast %85 : vector<64xf32> to vector<64x1xf32>
    %cst_44 = arith.constant 2.560000e+02 : f32
    %87 = vector.broadcast %cst_44 : f32 to vector<64x1xf32>
    %88 = arith.divf %86, %87 : vector<64x1xf32>
    %89 = vector.shape_cast %88 : vector<64x1xf32> to vector<64x1xf32>
    %90 = vector.broadcast %89 : vector<64x1xf32> to vector<64x128xf32>
    %cst_45 = arith.constant dense<0.000000e+00> : vector<64x128xf32>
    %91 = tpu.matmul %84, %90, %cst_45 {dimension_numbers = #tpu.dot_dimension_numbers<[1], [0], [0], [1], [0, 0, 1, 1], [], []>} : vector<64x64xf32>, vector<64x128xf32>, vector<64x128xf32> -> vector<64x128xf32>
    %92 = vector.extract_strided_slice %91 {offsets = [0, 0], sizes = [64, 1], strides = [1, 1]} : vector<64x128xf32> to vector<64x1xf32>
    %93 = vector.broadcast %92 : vector<64x1xf32> to vector<64x256xf32>
    %94 = arith.subf %74, %93 : vector<64x256xf32>
    %95 = arith.mulf %94, %94 : vector<64x256xf32>
    %cst_46 = arith.constant dense<0.000000e+00> : vector<64xf32>
    %96 = vector.multi_reduction <add>, %95, %cst_46 [1] : vector<64x256xf32> to vector<64xf32>
    %97 = vector.shape_cast %96 : vector<64xf32> to vector<64x1xf32>
    %cst_47 = arith.constant 2.560000e+02 : f32
    %98 = vector.broadcast %cst_47 : f32 to vector<64x1xf32>
    %99 = arith.divf %97, %98 : vector<64x1xf32>
    %100 = vector.shape_cast %99 : vector<64x1xf32> to vector<64x1xf32>
    %101 = vector.broadcast %100 : vector<64x1xf32> to vector<64x128xf32>
    %cst_48 = arith.constant dense<0.000000e+00> : vector<64x128xf32>
    %102 = tpu.matmul %84, %101, %cst_48 {dimension_numbers = #tpu.dot_dimension_numbers<[1], [0], [0], [1], [0, 0, 1, 1], [], []>} : vector<64x64xf32>, vector<64x128xf32>, vector<64x128xf32> -> vector<64x128xf32>
    %103 = vector.extract_strided_slice %102 {offsets = [0, 0], sizes = [64, 1], strides = [1, 1]} : vector<64x128xf32> to vector<64x1xf32>
    %c0_49 = arith.constant 0 : index
    %c0_50 = arith.constant 0 : index
    %104 = vector.load %arg4[%c0_49, %c0_50] : memref<64x1xf32, #tpu.memory_space<vmem>>, vector<64x1xf32>
    %cst_51 = arith.constant 9.99999974E-6 : f32
    %105 = vector.broadcast %cst_51 : f32 to vector<64x1xf32>
    %106 = arith.addf %103, %105 : vector<64x1xf32>
    %107 = math.rsqrt %106 : vector<64x1xf32>
    %108 = arith.mulf %104, %107 : vector<64x1xf32>
    %c0_52 = arith.constant 0 : index
    %c0_53 = arith.constant 0 : index
    %109 = vector.load %arg5[%c0_52, %c0_53] : memref<64x1xf32, #tpu.memory_space<vmem>>, vector<64x1xf32>
    %110 = arith.mulf %92, %108 : vector<64x1xf32>
    %111 = arith.subf %109, %110 : vector<64x1xf32>
    %112 = vector.broadcast %108 : vector<64x1xf32> to vector<64x256xf32>
    %113 = arith.mulf %74, %112 : vector<64x256xf32>
    %114 = vector.broadcast %111 : vector<64x1xf32> to vector<64x256xf32>
    %115 = arith.addf %113, %114 : vector<64x256xf32>
    %cst_54 = arith.constant 0.000000e+00 : f32
    %116 = vector.broadcast %cst_54 : f32 to vector<64x256xf32>
    %117 = arith.maximumf %115, %116 : vector<64x256xf32>
    %c0_55 = arith.constant 0 : index
    %c0_56 = arith.constant 0 : index
    %c0_57 = arith.constant 0 : index
    %118 = vector.load %arg6[%c0_55, %c0_56, %c0_57] : memref<1x64x256xf32, #tpu.memory_space<vmem>>, vector<1x64x256xf32>
    %119 = vector.shape_cast %118 : vector<1x64x256xf32> to vector<64x256xf32>
    %120 = vector.shape_cast %117 : vector<64x256xf32> to vector<1x64x256xf32>
    tpu.vector_store %arg6[%c0_55, %c0_56, %c0_57], %120 {strides = array<i32>} : memref<1x64x256xf32, #tpu.memory_space<vmem>>, vector<1x64x256xf32>,
    return
  }
  func.func @transform_0(%arg0: i32) -> (i32, i32, i32) {
    %c0_i32 = arith.constant 0 : i32
    %c0_i32_0 = arith.constant 0 : i32
    %c0_i32_1 = arith.constant 0 : i32
    return %arg0, %c0_i32, %c0_i32_0 : i32, i32, i32
  }
  func.func @transform_1(%arg0: i32) -> (i32, i32) {
    %c0_i32 = arith.constant 0 : i32
    %c0_i32_0 = arith.constant 0 : i32
    %c0_i32_1 = arith.constant 0 : i32
    return %c0_i32, %c0_i32_0 : i32, i32
  }
  func.func @transform_2(%arg0: i32) -> (i32, i32) {
    %c0_i32 = arith.constant 0 : i32
    %c0_i32_0 = arith.constant 0 : i32
    %c0_i32_1 = arith.constant 0 : i32
    return %c0_i32, %c0_i32_0 : i32, i32
  }
  func.func @transform_3(%arg0: i32) -> (i32, i32) {
    %c0_i32 = arith.constant 0 : i32
    %c0_i32_0 = arith.constant 0 : i32
    %c0_i32_1 = arith.constant 0 : i32
    return %c0_i32, %c0_i32_0 : i32, i32
  }
  func.func @transform_4(%arg0: i32) -> (i32, i32) {
    %c0_i32 = arith.constant 0 : i32
    %c0_i32_0 = arith.constant 0 : i32
    %c0_i32_1 = arith.constant 0 : i32
    return %c0_i32, %c0_i32_0 : i32, i32
  }
  func.func @transform_5(%arg0: i32) -> (i32, i32, i32) {
    %c0_i32 = arith.constant 0 : i32
    %c0_i32_0 = arith.constant 0 : i32
    %c0_i32_1 = arith.constant 0 : i32
    return %arg0, %c0_i32, %c0_i32_0 : i32, i32, i32
  }
}

</mosaic_0001>

<llo_original>
// kernel: cgr_forward.1
$region0: #{cgr_forward.1}
  #allocation0 [shape = 'u32[]', space=smem, size = 0x4, offset = 0x4, fixed_abs, tag = 'smem constant byte address 0x4 - core index']
  #allocation1 [shape = 'u32[144,128]{1,0:T(1,128)}', space=vmem, size = 0x12000, scoped, tag = 'internal scratch']
  #allocation2 [shape = 'f32[36,256]{1,0:T(8,128)}', space=vmem, size = 0xa000, scoped, tag = 'scratch operand']
  %s0 = inlined_call_operand.vmem [shape: f32[2,4,256], index: 0, kind: input, shape index: {}]
  %s1 = inlined_call_operand.vmem [shape: f32[64,36], index: 1, kind: input, shape index: {}]
  %s2 = inlined_call_operand.vmem [shape: f32[64,1], index: 2, kind: input, shape index: {}]
  %s3 = inlined_call_operand.vmem [shape: f32[64,1], index: 3, kind: input, shape index: {}]
  %s4 = inlined_call_operand.vmem [shape: f32[64,1], index: 4, kind: input, shape index: {}]
  %s5 = inlined_call_operand.vmem [shape: f32[2,64,256], index: 5, kind: output, shape index: {}]
  %s6 = sld [smem:[#allocation0]]
  $region53: #{cgr_forward.1} parent=0
    _
  %s8 = ssub.s32 1, %s6
  %s9 = scalar_select 0, %s8, %s6
  loop: start=0, step=1, limit=4
  $region2: #{cgr_forward.1} parent=0 // loop_pre_header
    _
  $region3: #{cgr_forward.1} parent=0 // loop_header
    %s11 = sphi 0, %s15
    %p12 = scmp.ge.s32.totalorder %s11, 4
    %s21 = sphi 0, %s23
    %s24 = sphi 0, %s21
    %s25 = sphi 0, %s24
    %s41 = sphi 0, %s25
    %s45 = sphi 0, %s45
    %s47 = sphi 0, %s45
    %s48 = sphi 0, %s47
    %s62 = sphi 0, %s48
    %s66 = sphi 0, %s66
    %s68 = sphi 0, %s66
    %s69 = sphi 0, %s68
    %s83 = sphi 0, %s69
    %s87 = sphi 0, %s87
    %s89 = sphi 0, %s87
    %s90 = sphi 0, %s89
    %s104 = sphi 0, %s90
    %s108 = sphi 0, %s108
    %s110 = sphi 0, %s108
    %s111 = sphi 0, %s110
    %s125 = sphi 0, %s111
    %s131 = sphi 0, %s133
    %s134 = sphi 0, %s131
    %s135 = sphi 0, %s134
    %s151 = sphi 0, %s135
  $region4: #{cgr_forward.1} parent=0 // loop_header_branch
    %14 = sbr.rel (%p12) target = $region8
  $region5: #{cgr_forward.1} parent=0 // loop_body
    %s16 = ssub.s32 %s11, 1
    %s17 = ssub.s32 %s11, 2
    %s18 = sadd.s32 %s11, 1
    %s19 = ssub.s32 %s11, %s18
    %p20 = scmp.eq.s32.totalorder %s19, 0
    %s22 = sadd.s32 %s21, 1
    %s23 = scalar_select %p20, %s21, %s22
    %p26 = pneg %p20
    %p27 = scmp.eq.s32.totalorder %s11, 1
    %p28 = por %p26, %p27
    %p29 = scmp.ne.s32.totalorder %s21, %s24
    %p30 = scmp.eq.s32.totalorder %s11, 0
    %p31 = por %p29, %p30
    %p32 = scmp.ne.s32.totalorder %s21, %s24
    %p33 = scmp.eq.s32.totalorder %s16, 1
    %p34 = por %p32, %p33
    %p35 = scmp.ne.s32.totalorder %s24, %s25
    %p36 = scmp.eq.s32.totalorder %s16, 0
    %p37 = por %p35, %p36
    %p38 = scmp.ne.s32.totalorder %s24, %s25
    %p39 = scmp.eq.s32.totalorder %s17, 1
    %p40 = por %p38, %p39
    %p42 = scmp.ne.s32.totalorder %s25, %s41
    %p43 = scmp.eq.s32.totalorder %s17, 0
    %p44 = por %p42, %p43
    %s46 = sadd.s32 %s45, 1
    %p49 = scmp.eq.s32.totalorder %s11, 1
    %p50 = scmp.ne.s32.totalorder %s45, %s47
    %p51 = scmp.eq.s32.totalorder %s11, 0
    %p52 = por %p50, %p51
    %p53 = scmp.ne.s32.totalorder %s45, %s47
    %p54 = scmp.eq.s32.totalorder %s16, 1
    %p55 = por %p53, %p54
    %p56 = scmp.ne.s32.totalorder %s47, %s48
    %p57 = scmp.eq.s32.totalorder %s16, 0
    %p58 = por %p56, %p57
    %p59 = scmp.ne.s32.totalorder %s47, %s48
    %p60 = scmp.eq.s32.totalorder %s17, 1
    %p61 = por %p59, %p60
    %p63 = scmp.ne.s32.totalorder %s48, %s62
    %p64 = scmp.eq.s32.totalorder %s17, 0
    %p65 = por %p63, %p64
    %s67 = sadd.s32 %s66, 1
    %p70 = scmp.eq.s32.totalorder %s11, 1
    %p71 = scmp.ne.s32.totalorder %s66, %s68
    %p72 = scmp.eq.s32.totalorder %s11, 0
    %p73 = por %p71, %p72
    %p74 = scmp.ne.s32.totalorder %s66, %s68
    %p75 = scmp.eq.s32.totalorder %s16, 1
    %p76 = por %p74, %p75
    %p77 = scmp.ne.s32.totalorder %s68, %s69
    %p78 = scmp.eq.s32.totalorder %s16, 0
    %p79 = por %p77, %p78
    %p80 = scmp.ne.s32.totalorder %s68, %s69
    %p81 = scmp.eq.s32.totalorder %s17, 1
    %p82 = por %p80, %p81
    %p84 = scmp.ne.s32.totalorder %s69, %s83
    %p85 = scmp.eq.s32.totalorder %s17, 0
    %p86 = por %p84, %p85
    %s88 = sadd.s32 %s87, 1
    %p91 = scmp.eq.s32.totalorder %s11, 1
    %p92 = scmp.ne.s32.totalorder %s87, %s89
    %p93 = scmp.eq.s32.totalorder %s11, 0
    %p94 = por %p92, %p93
    %p95 = scmp.ne.s32.totalorder %s87, %s89
    %p96 = scmp.eq.s32.totalorder %s16, 1
    %p97 = por %p95, %p96
    %p98 = scmp.ne.s32.totalorder %s89, %s90
    %p99 = scmp.eq.s32.totalorder %s16, 0
    %p100 = por %p98, %p99
    %p101 = scmp.ne.s32.totalorder %s89, %s90
    %p102 = scmp.eq.s32.totalorder %s17, 1
    %p103 = por %p101, %p102
    %p105 = scmp.ne.s32.totalorder %s90, %s104
    %p106 = scmp.eq.s32.totalorder %s17, 0
    %p107 = por %p105, %p106
    %s109 = sadd.s32 %s108, 1
    %p112 = scmp.eq.s32.totalorder %s11, 1
    %p113 = scmp.ne.s32.totalorder %s108, %s110
    %p114 = scmp.eq.s32.totalorder %s11, 0
    %p115 = por %p113, %p114
    %p116 = scmp.ne.s32.totalorder %s108, %s110
    %p117 = scmp.eq.s32.totalorder %s16, 1
    %p118 = por %p116, %p117
    %p119 = scmp.ne.s32.totalorder %s110, %s111
    %p120 = scmp.eq.s32.totalorder %s16, 0
    %p121 = por %p119, %p120
    %p122 = scmp.ne.s32.totalorder %s110, %s111
    %p123 = scmp.eq.s32.totalorder %s17, 1
    %p124 = por %p122, %p123
    %p126 = scmp.ne.s32.totalorder %s111, %s125
    %p127 = scmp.eq.s32.totalorder %s17, 0
    %p128 = por %p126, %p127
    %s129 = ssub.s32 %s11, %s18
    %p130 = scmp.eq.s32.totalorder %s129, 0
    %s132 = sadd.s32 %s131, 1
    %s133 = scalar_select %p130, %s131, %s132
    %p136 = pneg %p130
    %p137 = scmp.eq.s32.totalorder %s11, 1
    %p138 = por %p136, %p137
    %p139 = scmp.ne.s32.totalorder %s131, %s134
    %p140 = scmp.eq.s32.totalorder %s11, 0
    %p141 = por %p139, %p140
    %p142 = scmp.ne.s32.totalorder %s131, %s134
    %p143 = scmp.eq.s32.totalorder %s16, 1
    %p144 = por %p142, %p143
    %p145 = scmp.ne.s32.totalorder %s134, %s135
    %p146 = scmp.eq.s32.totalorder %s16, 0
    %p147 = por %p145, %p146
    %p148 = scmp.ne.s32.totalorder %s134, %s135
    %p149 = scmp.eq.s32.totalorder %s17, 1
    %p150 = por %p148, %p149
    %p152 = scmp.ne.s32.totalorder %s135, %s151
    %p153 = scmp.eq.s32.totalorder %s17, 0
    %p154 = por %p152, %p153
    %p155 = scmp.le.s32.totalorder 1, %s11
    %p156 = scmp.lt.s32.totalorder %s11, 3
    %p157 = pnand %p155, %p156
    %p158 = pneg %p157
    // Predicated region
    $region9: #{cgr_forward.1} parent=5 // pred_check
      _
    $region10: #{cgr_forward.1} parent=5 // pred_check_branch
      %160 = sbr.rel (%p157) target = $region12
    $region11: #{cgr_forward.1} parent=5 // pred_region
      %s161 = ssub.s32 %s11, 1
      // Predicated region
      $region13: #{cgr_forward.1} parent=11 // pred_check
        %p162 = pneg %p58
      $region14: #{cgr_forward.1} parent=11 // pred_check_branch
        %164 = sbr.rel (%p162) target = $region16
      $region15: #{cgr_forward.1} parent=11 // pred_region
        _
      $region16: #{cgr_forward.1} parent=11 // pred_fallthru
        _
      // Predicated region
      $region17: #{cgr_forward.1} parent=11 // pred_check
        %p165 = pneg %p79
      $region18: #{cgr_forward.1} parent=11 // pred_check_branch
        %167 = sbr.rel (%p165) target = $region20
      $region19: #{cgr_forward.1} parent=11 // pred_region
        _
      $region20: #{cgr_forward.1} parent=11 // pred_fallthru
        _
      // Predicated region
      $region21: #{cgr_forward.1} parent=11 // pred_check
        %p168 = pneg %p100
      $region22: #{cgr_forward.1} parent=11 // pred_check_branch
        %170 = sbr.rel (%p168) target = $region24
      $region23: #{cgr_forward.1} parent=11 // pred_region
        _
      $region24: #{cgr_forward.1} parent=11 // pred_fallthru
        _
      // Predicated region
      $region25: #{cgr_forward.1} parent=11 // pred_check
        %p171 = pneg %p121
      $region26: #{cgr_forward.1} parent=11 // pred_check_branch
        %173 = sbr.rel (%p171) target = $region28
      $region27: #{cgr_forward.1} parent=11 // pred_region
        _
      $region28: #{cgr_forward.1} parent=11 // pred_fallthru
        _
    $region12: #{cgr_forward.1} parent=5 // pred_fallthru
      _
    %p174 = scmp.lt.s32.totalorder %s11, 2
    // Predicated region
    $region29: #{cgr_forward.1} parent=5 // pred_check
      %p175 = pneg %p174
    $region30: #{cgr_forward.1} parent=5 // pred_check_branch
      %177 = sbr.rel (%p175) target = $region32
    $region31: #{cgr_forward.1} parent=5 // pred_region
      // Predicated region
      $region33: #{cgr_forward.1} parent=31 // pred_check
        %p178 = pneg %p31
      $region34: #{cgr_forward.1} parent=31 // pred_check_branch
        %180 = sbr.rel (%p178) target = $region36
      $region35: #{cgr_forward.1} parent=31 // pred_region
        %p181 = scmp.lt.s32.totalorder %s11, 1
        %s182 = scalar_select %p181, %s11, 1
        %s183 = smul.addr %s182, 2
        %s184 = smul.addr %s183, 4
        %s185 = scalar_lea.vmem %s0, %s184
      $region36: #{cgr_forward.1} parent=31 // pred_fallthru
        _
    $region32: #{cgr_forward.1} parent=5 // pred_fallthru
      _
    %p186 = scmp.le.s32.totalorder 1, %s11
    %p187 = scmp.lt.s32.totalorder %s11, 3
    %p188 = pnand %p186, %p187
    %p189 = pneg %p188
    // Predicated region
    $region37: #{cgr_forward.1} parent=5 // pred_check
      _
    $region38: #{cgr_forward.1} parent=5 // pred_check_branch
      %191 = sbr.rel (%p188) target = $region40
    $region39: #{cgr_forward.1} parent=5 // pred_region
      %s192 = ssub.s32 %s11, 1
      %p193 = scmp.lt.s32.totalorder %s16, 1
      %s194 = scalar_select %p193, %s16, 1
      %s195 = smul.addr %s194, 2
      %s196 = smul.addr %s195, 4
      %s197 = scalar_lea.vmem %s0, %s196
      %p198 = pneg %p37
      %p199 = pneg %p34
      %p200 = pneg %p58
      %p201 = pneg %p55
      %p202 = pneg %p79
      %p203 = pneg %p76
      %p204 = pneg %p100
      %p205 = pneg %p97
      %p206 = pneg %p121
      %p207 = pneg %p118
      %p208 = pneg %p147
      %p209 = pneg %p144
      %p210 = scmp.lt.s32.totalorder %s16, 1
      %s211 = scalar_select %p210, %s16, 1
      %s212 = smul.addr %s211, 16
      %s213 = smul.addr %s212, 8
      %s214 = scalar_lea.vmem %s5, %s213
      %p215 = scmp.lt.s32.totalorder %s16, 1
      %s216 = scalar_select %p215, %s16, 1
      %s217 = smul.addr %s216, 2
      %s218 = smul.addr %s217, 4
      %s219 = scalar_lea.vmem %s0, %s218
      %p220 = scmp.lt.s32.totalorder %s16, 1
      %s221 = scalar_select %p220, %s16, 1
      %s222 = smul.addr %s221, 16
      %s223 = smul.addr %s222, 8
      %s224 = scalar_lea.vmem %s5, %s223
      %v225 = vld [vmem:[%s219] sm:$0xff]
      %v226 = vlaneseq
      %v227 = vand.u32 %v226, 127
      %v228 = vadd.s32 %v227, 128
      %v229 = vshra.s32 %v227, 4
      %v230 = vshra.s32 %v228, 4
      %v231 = vmul.u32 %v229, 16
      %v232 = vmul.u32 %v230, 16
      %v233 = vsub.s32 %v227, %v231
      %v234 = vsub.s32 %v228, %v232
      %v236 = vcombine.high %v225, %v225
      %238 = vrot.lane.b32.xlu0 %v225, 17
      %v239 = vpop.permute.xlu0 %238
      %240 = vrot.lane.b32.xlu0 %v236, 17
      %v241 = vpop.permute.xlu0 %240
      %vm242 = vcmp.lt.s32.totalorder %v227, 17
      %v243 = vsel %vm242, %v239, %v241
      %v244 = vsel %vm242, %v241, %v239
      %vm245 = vcmp.ge.s32.totalorder %v229, 1
      %vm246 = vcmp.ge.s32.totalorder %v230, 1
      %vm247 = vcmp.ge.s32.totalorder %v233, 1
      %vm248 = vcmp.ge.s32.totalorder %v234, 1
      %vm249 = vmand %vm245, %vm247
      %vm250 = vmand %vm246, %vm248
      %v251 = vsel %vm249, %v244, 0.0
      %v252 = vsel %vm250, %v243, 0.0
      %253 = vst [vmem:[#allocation2] sm:$0xf] %v251
      %254 = vst [vmem:[#allocation2 + $0x8] sm:$0xf] %v252
      %255 = vrot.lane.b32.xlu0 %v225, 16
      %v256 = vpop.permute.xlu0 %255
      %257 = vrot.lane.b32.xlu0 %v236, 16
      %v258 = vpop.permute.xlu0 %257
      %vm259 = vcmp.lt.s32.totalorder %v227, 16
      %v260 = vsel %vm259, %v256, %v258
      %v261 = vsel %vm259, %v258, %v256
      %v262 = vsel %vm245, %v261, 0.0
      %v263 = vsel %vm246, %v260, 0.0
      %v266 = vrot.slane %v262, 4
      %v267 = vrot.slane %v263, 4
      %270 = vst [vmem:[#allocation2] sm:$0xf0] %v266
      %271 = vst [vmem:[#allocation2 + $0x8] sm:$0xf0] %v267
      %272 = vrot.lane.b32.xlu0 %v225, 15
      %v273 = vpop.permute.xlu0 %272
      %274 = vrot.lane.b32.xlu0 %v236, 15
      %v275 = vpop.permute.xlu0 %274
      %vm276 = vcmp.lt.s32.totalorder %v227, 15
      %v277 = vsel %vm276, %v273, %v275
      %v278 = vsel %vm276, %v275, %v273
      %vm279 = vcmp.lt.s32.totalorder %v233, 15
      %vm280 = vcmp.lt.s32.totalorder %v234, 15
      %vm281 = vmand %vm245, %vm279
      %vm282 = vmand %vm246, %vm280
      %v283 = vsel %vm281, %v278, 0.0
      %v284 = vsel %vm282, %v277, 0.0
      %285 = vst [vmem:[#allocation2 + $0x10] sm:$0xf] %v283
      %286 = vst [vmem:[#allocation2 + $0x18] sm:$0xf] %v284
      %287 = vrot.lane.b32.xlu0 %v225, 1
      %v288 = vpop.permute.xlu0 %287
      %289 = vrot.lane.b32.xlu0 %v236, 1
      %v290 = vpop.permute.xlu0 %289
      %vm291 = vcmp.lt.s32.totalorder %v227, 1
      %v292 = vsel %vm291, %v288, %v290
      %v293 = vsel %vm291, %v290, %v288
      %v294 = vsel %vm247, %v293, 0.0
      %v295 = vsel %vm248, %v292, 0.0
      %v298 = vrot.slane %v294, 4
      %v299 = vrot.slane %v295, 4
      %302 = vst [vmem:[#allocation2 + $0x10] sm:$0xf0] %v298
      %303 = vst [vmem:[#allocation2 + $0x18] sm:$0xf0] %v299
      %304 = vst [vmem:[#allocation2 + $0x20] sm:$0xf] %v225
      %305 = vst [vmem:[#allocation2 + $0x28] sm:$0xf] %v236
      %306 = vrot.lane.b32.xlu0 %v225, 127
      %v307 = vpop.permute.xlu0 %306
      %308 = vrot.lane.b32.xlu0 %v236, 127
      %v309 = vpop.permute.xlu0 %308
      %vm310 = vcmp.lt.s32.totalorder %v227, 127
      %v311 = vsel %vm310, %v307, %v309
      %v312 = vsel %vm310, %v309, %v307
      %v313 = vsel %vm279, %v311, 0.0
      %v314 = vsel %vm280, %v312, 0.0
      %v317 = vrot.slane %v313, 4
      %v318 = vrot.slane %v314, 4
      %321 = vst [vmem:[#allocation2 + $0x20] sm:$0xf0] %v317
      %322 = vst [vmem:[#allocation2 + $0x28] sm:$0xf0] %v318
      %323 = vrot.lane.b32.xlu0 %v225, 113
      %v324 = vpop.permute.xlu0 %323
      %325 = vrot.lane.b32.xlu0 %v236, 113
      %v326 = vpop.permute.xlu0 %325
      %vm327 = vcmp.lt.s32.totalorder %v227, 113
      %v328 = vsel %vm327, %v324, %v326
      %v329 = vsel %vm327, %v326, %v324
      %vm330 = vcmp.lt.s32.totalorder %v229, 15
      %vm331 = vcmp.lt.s32.totalorder %v230, 15
      %vm332 = vmand %vm330, %vm247
      %vm333 = vmand %vm331, %vm248
      %v334 = vsel %vm332, %v328, 0.0
      %v335 = vsel %vm333, %v329, 0.0
      %336 = vst [vmem:[#allocation2 + $0x30] sm:$0xf] %v334
      %337 = vst [vmem:[#allocation2 + $0x38] sm:$0xf] %v335
      %338 = vrot.lane.b32.xlu0 %v225, 112
      %v339 = vpop.permute.xlu0 %338
      %340 = vrot.lane.b32.xlu0 %v236, 112
      %v341 = vpop.permute.xlu0 %340
      %vm342 = vcmp.lt.s32.totalorder %v227, 112
      %v343 = vsel %vm342, %v339, %v341
      %v344 = vsel %vm342, %v341, %v339
      %v345 = vsel %vm330, %v343, 0.0
      %v346 = vsel %vm331, %v344, 0.0
      %v349 = vrot.slane %v345, 4
      %v350 = vrot.slane %v346, 4
      %353 = vst [vmem:[#allocation2 + $0x30] sm:$0xf0] %v349
      %354 = vst [vmem:[#allocation2 + $0x38] sm:$0xf0] %v350
      %355 = vrot.lane.b32.xlu0 %v225, 111
      %v356 = vpop.permute.xlu0 %355
      %357 = vrot.lane.b32.xlu0 %v236, 111
      %v358 = vpop.permute.xlu0 %357
      %vm359 = vcmp.lt.s32.totalorder %v227, 111
      %v360 = vsel %vm359, %v356, %v358
      %v361 = vsel %vm359, %v358, %v356
      %vm362 = vmand %vm330, %vm279
      %vm363 = vmand %vm331, %vm280
      %v364 = vsel %vm362, %v360, 0.0
      %v365 = vsel %vm363, %v361, 0.0
      %366 = vst [vmem:[#allocation2 + $0x40] sm:$0xf] %v364
      %367 = vst [vmem:[#allocation2 + $0x48] sm:$0xf] %v365
      %v368 = vld [vmem:[%s1] sm:$0xff]
      %v369 = vld [vmem:[%s1 + $0x8] sm:$0xff]
      %v370 = vld [vmem:[%s1 + $0x10] sm:$0xff]
      %v371 = vld [vmem:[%s1 + $0x18] sm:$0xff]
      %v372 = vld [vmem:[%s1 + $0x20] sm:$0xff]
      %v373 = vld [vmem:[%s1 + $0x28] sm:$0xff]
      %v374 = vld [vmem:[%s1 + $0x30] sm:$0xff]
      %v375 = vld [vmem:[%s1 + $0x38] sm:$0xff]
      %v376 = vld [vmem:[#allocation2] sm:$0xff]
      %v377 = vld [vmem:[#allocation2 + $0x8] sm:$0xff]
      %v378 = vld [vmem:[#allocation2 + $0x10] sm:$0xff]
      %v379 = vld [vmem:[#allocation2 + $0x18] sm:$0xff]
      %v380 = vld [vmem:[#allocation2 + $0x20] sm:$0xff]
      %v381 = vld [vmem:[#allocation2 + $0x28] sm:$0xff]
      %v382 = vld [vmem:[#allocation2 + $0x30] sm:$0xff]
      %v383 = vld [vmem:[#allocation2 + $0x38] sm:$0xff]
      %v384 = vld [vmem:[#allocation2 + $0x40] sm:$0xf]
      %v385 = vld [vmem:[#allocation2 + $0x48] sm:$0xf]
      %v386 = vld [vmem:[%s2] sm:$0xff]
      %v387 = vld [vmem:[%s2 + $0x8] sm:$0xff]
      %v388 = vld [vmem:[%s2 + $0x10] sm:$0xff]
      %v389 = vld [vmem:[%s2 + $0x18] sm:$0xff]
      %v390 = vld [vmem:[%s2 + $0x20] sm:$0xff]
      %v391 = vld [vmem:[%s2 + $0x28] sm:$0xff]
      %v392 = vld [vmem:[%s2 + $0x30] sm:$0xff]
      %v393 = vld [vmem:[%s2 + $0x38] sm:$0xff]
      %395 = vset.pattern.permute.xlu0 0
      %396 = vperm.xlu0 %395, %v386
      %v397 = vpop.permute.xlu0 %396
      %400 = vset.pattern.permute.xlu0 0
      %401 = vperm.xlu0 %400, %v387
      %v402 = vpop.permute.xlu0 %401
      %405 = vset.pattern.permute.xlu0 0
      %406 = vperm.xlu0 %405, %v388
      %v407 = vpop.permute.xlu0 %406
      %410 = vset.pattern.permute.xlu0 0
      %411 = vperm.xlu0 %410, %v389
      %v412 = vpop.permute.xlu0 %411
      %415 = vset.pattern.permute.xlu0 0
      %416 = vperm.xlu0 %415, %v390
      %v417 = vpop.permute.xlu0 %416
      %420 = vset.pattern.permute.xlu0 0
      %421 = vperm.xlu0 %420, %v391
      %v422 = vpop.permute.xlu0 %421
      %425 = vset.pattern.permute.xlu0 0
      %426 = vperm.xlu0 %425, %v392
      %v427 = vpop.permute.xlu0 %426
      %430 = vset.pattern.permute.xlu0 0
      %431 = vperm.xlu0 %430, %v393
      %v432 = vpop.permute.xlu0 %431
      %vm434 = vcmask 293888
      %v436 = vsel %vm434, %v368, 0
      %v439 = vsel %vm434, %v369, 0
      %v442 = vsel %vm434, %v370, 0
      %v445 = vsel %vm434, %v371, 0
      %v448 = vsel %vm434, %v372, 0
      %v451 = vsel %vm434, %v373, 0
      %v454 = vsel %vm434, %v374, 0
      %v457 = vsel %vm434, %v375, 0
      %vm459 = vcmask 1043456
      %v461 = vsel %vm459, %v384, 0
      %v464 = vsel %vm459, %v385, 0
      %466 = vmatprep.subr.mxu0 %v377
      %467 = vmatpush1.msra.mxu0 %v376
      %468 = vmatprep.subr.mxu0 %v379
      %469 = vmatpush1.msra.mxu0 %v378
      %470 = vmatprep.subr.mxu0 %v381
      %471 = vmatpush1.msra.mxu0 %v380
      %472 = vmatprep.subr.mxu0 %v383
      %473 = vmatpush1.msra.mxu0 %v382
      %474 = vmatprep.subr.mxu0 %v464
      %475 = vmatpush1.msra.mxu0 %v461
      %476 = vmatprep.subr.mxu0 0.0
      %477 = vmatpush1.msra.mxu0 0.0
      %478 = vmatprep.subr.mxu0 0.0
      %479 = vmatpush1.msra.mxu0 0.0
      %480 = vmatprep.subr.mxu0 0.0
      %481 = vmatpush1.msra.mxu0 0.0
      %482 = vmatprep.subr.mxu0 0.0
      %483 = vmatpush1.msra.mxu0 0.0
      %484 = vmatprep.subr.mxu0 0.0
      %485 = vmatpush1.msra.mxu0 0.0
      %486 = vmatprep.subr.mxu0 0.0
      %487 = vmatpush1.msra.mxu0 0.0
      %488 = vmatprep.subr.mxu0 0.0
      %489 = vmatpush1.msra.mxu0 0.0
      %490 = vmatprep.subr.mxu0 0.0
      %491 = vmatpush1.msra.mxu0 0.0
      %492 = vmatprep.subr.mxu0 0.0
      %493 = vmatpush1.msra.mxu0 0.0
      %494 = vmatprep.subr.mxu0 0.0
      %495 = vmatpush1.msra.mxu0 0.0
      %496 = vmatprep.subr.mxu0 0.0
      %497 = vmatpush1.msra.mxu0 0.0
      %498 = vmatprep.subr.mxu0 0.0
      %499 = vmatpush1.msra.mxu0 0.0
      %500 = vmatprep.subr.mxu0 0.0
      %501 = vmatpush1.msra.mxu0 0.0
      %502 = vmatprep.subr.mxu0 0.0
      %503 = vmatpush1.msra.mxu0 0.0
      %504 = vmatprep.subr.mxu0 0.0
      %505 = vmatpush1.msra.mxu0 0.0
      %506 = vmatprep.subr.mxu0 0.0
      %507 = vmatpush1.msra.mxu0 0.0
      %508 = vmatprep.subr.mxu0 0.0
      %509 = vmatpush1.msra.mxu0 0.0
      %510 = vmatprep.subr.mxu0 0.0
      %511 = vmatpush1.msra.mxu0 0.0
      %512 = vmatprep.subr.mxu0 0.0
      %513 = vmatpush1.msra.mxu0 0.0
      %514 = vmatprep.subr.mxu0 0.0
      %515 = vmatpush1.msra.mxu0 0.0
      %516 = vmatprep.subr.mxu0 0.0
      %517 = vmatpush1.msra.mxu0 0.0
      %518 = vmatprep.subr.mxu0 0.0
      %519 = vmatpush1.msra.mxu0 0.0
      %520 = vmatprep.subr.mxu0 0.0
      %521 = vmatpush1.msra.mxu0 0.0
      %522 = vmatprep.subr.mxu0 0.0
      %523 = vmatpush1.msra.mxu0 0.0
      %524 = vmatprep.subr.mxu0 0.0
      %525 = vmatpush1.msra.mxu0 0.0
      %526 = vmatprep.subr.mxu0 0.0
      %527 = vmatpush1.msra.mxu0 0.0
      %528 = vmatprep.subr.mxu0 0.0
      %529 = vmatpush1.msra.mxu0 0.0
      %530 = vmatprep.mubr.f32.mxu0 0.0
      %531 = vmatmul.mubr.f32.gmra.mrb[0].mxu0 %v436
      %v532 = vpop.f32.mrb[0].mxu0
      %v533 = vadd.f32 %v397, %v532
      %v534 = vpop.f32.mrb[0].mxu0
      %v535 = vadd.f32 %v397, %v534
      %536 = vmatprep.mubr.f32.mxu0 0.0
      %537 = vmatmul.mubr.f32.gmra.mrb[0].mxu0 %v439
      %v538 = vpop.f32.mrb[0].mxu0
      %v539 = vadd.f32 %v402, %v538
      %v540 = vpop.f32.mrb[0].mxu0
      %v541 = vadd.f32 %v402, %v540
      %542 = vmatprep.mubr.f32.mxu0 0.0
      %543 = vmatmul.mubr.f32.gmra.mrb[0].mxu0 %v442
      %v544 = vpop.f32.mrb[0].mxu0
      %v545 = vadd.f32 %v407, %v544
      %v546 = vpop.f32.mrb[0].mxu0
      %v547 = vadd.f32 %v407, %v546
      %548 = vmatprep.mubr.f32.mxu0 0.0
      %549 = vmatmul.mubr.f32.gmra.mrb[0].mxu0 %v445
      %v550 = vpop.f32.mrb[0].mxu0
      %v551 = vadd.f32 %v412, %v550
      %v552 = vpop.f32.mrb[0].mxu0
      %v553 = vadd.f32 %v412, %v552
      %554 = vmatprep.mubr.f32.mxu0 0.0
      %555 = vmatmul.mubr.f32.gmra.mrb[0].mxu0 %v448
      %v556 = vpop.f32.mrb[0].mxu0
      %v557 = vadd.f32 %v417, %v556
      %v558 = vpop.f32.mrb[0].mxu0
      %v559 = vadd.f32 %v417, %v558
      %560 = vmatprep.mubr.f32.mxu0 0.0
      %561 = vmatmul.mubr.f32.gmra.mrb[0].mxu0 %v451
      %v562 = vpop.f32.mrb[0].mxu0
      %v563 = vadd.f32 %v422, %v562
      %v564 = vpop.f32.mrb[0].mxu0
      %v565 = vadd.f32 %v422, %v564
      %566 = vmatprep.mubr.f32.mxu0 0.0
      %567 = vmatmul.mubr.f32.gmra.mrb[0].mxu0 %v454
      %v568 = vpop.f32.mrb[0].mxu0
      %v569 = vadd.f32 %v427, %v568
      %v570 = vpop.f32.mrb[0].mxu0
      %v571 = vadd.f32 %v427, %v570
      %572 = vmatprep.mubr.f32.mxu0 0.0
      %573 = vmatmul.mubr.f32.gmra.mrb[0].mxu0 %v457
      %v574 = vpop.f32.mrb[0].mxu0
      %v575 = vadd.f32 %v432, %v574
      %v576 = vpop.f32.mrb[0].mxu0
      %v577 = vadd.f32 %v432, %v576
      %578 = vdwg.mxu0
      %v579 = vlaneseq
      %v580 = vshrl.u32 %v579, 7
      %v581 = vadd.s32 %v580, 8
      %v582 = vadd.s32 %v580, 16
      %v583 = vadd.s32 %v580, 24
      %v584 = vadd.s32 %v580, 32
      %v585 = vadd.s32 %v580, 40
      %v586 = vadd.s32 %v580, 48
      %v587 = vadd.s32 %v580, 56
      %v588 = vshra.s32 %v580, 1
      %v589 = vshra.s32 %v581, 1
      %v590 = vshra.s32 %v582, 1
      %v591 = vshra.s32 %v583, 1
      %v592 = vshra.s32 %v584, 1
      %v593 = vshra.s32 %v585, 1
      %v594 = vshra.s32 %v586, 1
      %v595 = vshra.s32 %v587, 1
      %v596 = vshra.s32 %v227, 1
      %vm597 = vcmp.eq.s32.totalorder %v588, %v596
      %vm598 = vcmp.eq.s32.totalorder %v589, %v596
      %vm599 = vcmp.eq.s32.totalorder %v590, %v596
      %vm600 = vcmp.eq.s32.totalorder %v591, %v596
      %vm601 = vcmp.eq.s32.totalorder %v592, %v596
      %vm602 = vcmp.eq.s32.totalorder %v593, %v596
      %vm603 = vcmp.eq.s32.totalorder %v594, %v596
      %vm604 = vcmp.eq.s32.totalorder %v595, %v596
      %v605 = vsel %vm597, 0.5, 0.0
      %v606 = vsel %vm598, 0.5, 0.0
      %v607 = vsel %vm599, 0.5, 0.0
      %v608 = vsel %vm600, 0.5, 0.0
      %v609 = vsel %vm601, 0.5, 0.0
      %v610 = vsel %vm602, 0.5, 0.0
      %v611 = vsel %vm603, 0.5, 0.0
      %v612 = vsel %vm604, 0.5, 0.0
      %v613 = vadd.f32 %v533, %v535
      %614 = vadd.xlane.f32.xlu0 %v613
      %v615 = vpop.xlane.xlu0 %614
      %v616 = vadd.f32 %v539, %v541
      %617 = vadd.xlane.f32.xlu0 %v616
      %v618 = vpop.xlane.xlu0 %617
      %v619 = vadd.f32 %v545, %v547
      %620 = vadd.xlane.f32.xlu0 %v619
      %v621 = vpop.xlane.xlu0 %620
      %v622 = vadd.f32 %v551, %v553
      %623 = vadd.xlane.f32.xlu0 %v622
      %v624 = vpop.xlane.xlu0 %623
      %v625 = vadd.f32 %v557, %v559
      %626 = vadd.xlane.f32.xlu0 %v625
      %v627 = vpop.xlane.xlu0 %626
      %v628 = vadd.f32 %v563, %v565
      %629 = vadd.xlane.f32.xlu0 %v628
      %v630 = vpop.xlane.xlu0 %629
      %v631 = vadd.f32 %v569, %v571
      %632 = vadd.xlane.f32.xlu0 %v631
      %v633 = vpop.xlane.xlu0 %632
      %v634 = vadd.f32 %v575, %v577
      %635 = vadd.xlane.f32.xlu0 %v634
      %v636 = vpop.xlane.xlu0 %635
      %v637 = vrcp.pop 256.0
      %v638 = vmul.f32 %v615, %v637
      %v639 = vmul.f32 %v618, %v637
      %v640 = vmul.f32 %v621, %v637
      %v641 = vmul.f32 %v624, %v637
      %v642 = vmul.f32 %v627, %v637
      %v643 = vmul.f32 %v630, %v637
      %v644 = vmul.f32 %v633, %v637
      %v645 = vmul.f32 %v636, %v637
      %vm646 = vcmask 523264
      %v648 = vsel %vm646, %v605, 0
      %v651 = vsel %vm646, %v606, 0
      %v654 = vsel %vm646, %v607, 0
      %v657 = vsel %vm646, %v608, 0
      %v660 = vsel %vm646, %v609, 0
      %v663 = vsel %vm646, %v610, 0
      %v666 = vsel %vm646, %v611, 0
      %v669 = vsel %vm646, %v612, 0
      %671 = vmatprep.subr.mxu0 0.0
      %672 = vmatpush1.msra.mxu0 %v638
      %673 = vmatprep.subr.mxu0 0.0
      %674 = vmatpush1.msra.mxu0 %v639
      %675 = vmatprep.subr.mxu0 0.0
      %676 = vmatpush1.msra.mxu0 %v640
      %677 = vmatprep.subr.mxu0 0.0
      %678 = vmatpush1.msra.mxu0 %v641
      %679 = vmatprep.subr.mxu0 0.0
      %680 = vmatpush1.msra.mxu0 %v642
      %681 = vmatprep.subr.mxu0 0.0
      %682 = vmatpush1.msra.mxu0 %v643
      %683 = vmatprep.subr.mxu0 0.0
      %684 = vmatpush1.msra.mxu0 %v644
      %685 = vmatprep.subr.mxu0 0.0
      %686 = vmatpush1.msra.mxu0 %v645
      %687 = vmatprep.subr.mxu0 0.0
      %688 = vmatpush1.msra.mxu0 0.0
      %689 = vmatprep.subr.mxu0 0.0
      %690 = vmatpush1.msra.mxu0 0.0
      %691 = vmatprep.subr.mxu0 0.0
      %692 = vmatpush1.msra.mxu0 0.0
      %693 = vmatprep.subr.mxu0 0.0
      %694 = vmatpush1.msra.mxu0 0.0
      %695 = vmatprep.subr.mxu0 0.0
      %696 = vmatpush1.msra.mxu0 0.0
      %697 = vmatprep.subr.mxu0 0.0
      %698 = vmatpush1.msra.mxu0 0.0
      %699 = vmatprep.subr.mxu0 0.0
      %700 = vmatpush1.msra.mxu0 0.0
      %701 = vmatprep.subr.mxu0 0.0
      %702 = vmatpush1.msra.mxu0 0.0
      %703 = vmatprep.subr.mxu0 0.0
      %704 = vmatpush1.msra.mxu0 0.0
      %705 = vmatprep.subr.mxu0 0.0
      %706 = vmatpush1.msra.mxu0 0.0
      %707 = vmatprep.subr.mxu0 0.0
      %708 = vmatpush1.msra.mxu0 0.0
      %709 = vmatprep.subr.mxu0 0.0
      %710 = vmatpush1.msra.mxu0 0.0
      %711 = vmatprep.subr.mxu0 0.0
      %712 = vmatpush1.msra.mxu0 0.0
      %713 = vmatprep.subr.mxu0 0.0
      %714 = vmatpush1.msra.mxu0 0.0
      %715 = vmatprep.subr.mxu0 0.0
      %716 = vmatpush1.msra.mxu0 0.0
      %717 = vmatprep.subr.mxu0 0.0
      %718 = vmatpush1.msra.mxu0 0.0
      %719 = vmatprep.subr.mxu0 0.0
      %720 = vmatpush1.msra.mxu0 0.0
      %721 = vmatprep.subr.mxu0 0.0
      %722 = vmatpush1.msra.mxu0 0.0
      %723 = vmatprep.subr.mxu0 0.0
      %724 = vmatpush1.msra.mxu0 0.0
      %725 = vmatprep.subr.mxu0 0.0
      %726 = vmatpush1.msra.mxu0 0.0
      %727 = vmatprep.subr.mxu0 0.0
      %728 = vmatpush1.msra.mxu0 0.0
      %729 = vmatprep.subr.mxu0 0.0
      %730 = vmatpush1.msra.mxu0 0.0
      %731 = vmatprep.subr.mxu0 0.0
      %732 = vmatpush1.msra.mxu0 0.0
      %733 = vmatprep.subr.mxu0 0.0
      %734 = vmatpush1.msra.mxu0 0.0
      %735 = vmatprep.mubr.f32.mxu0 0.0
      %736 = vmatmul.mubr.f32.gmra.mrb[0].mxu0 %v648
      %v737 = vpop.f32.mrb[0].mxu0
      %v738 = vadd.f32 0.0, %v737
      %v739 = vpop.f32.mrb[0].mxu0
      %740 = vmatprep.mubr.f32.mxu0 0.0
      %741 = vmatmul.mubr.f32.gmra.mrb[0].mxu0 %v651
      %v742 = vpop.f32.mrb[0].mxu0
      %v743 = vadd.f32 0.0, %v742
      %v744 = vpop.f32.mrb[0].mxu0
      %745 = vmatprep.mubr.f32.mxu0 0.0
      %746 = vmatmul.mubr.f32.gmra.mrb[0].mxu0 %v654
      %v747 = vpop.f32.mrb[0].mxu0
      %v748 = vadd.f32 0.0, %v747
      %v749 = vpop.f32.mrb[0].mxu0
      %750 = vmatprep.mubr.f32.mxu0 0.0
      %751 = vmatmul.mubr.f32.gmra.mrb[0].mxu0 %v657
      %v752 = vpop.f32.mrb[0].mxu0
      %v753 = vadd.f32 0.0, %v752
      %v754 = vpop.f32.mrb[0].mxu0
      %755 = vmatprep.mubr.f32.mxu0 0.0
      %756 = vmatmul.mubr.f32.gmra.mrb[0].mxu0 %v660
      %v757 = vpop.f32.mrb[0].mxu0
      %v758 = vadd.f32 0.0, %v757
      %v759 = vpop.f32.mrb[0].mxu0
      %760 = vmatprep.mubr.f32.mxu0 0.0
      %761 = vmatmul.mubr.f32.gmra.mrb[0].mxu0 %v663
      %v762 = vpop.f32.mrb[0].mxu0
      %v763 = vadd.f32 0.0, %v762
      %v764 = vpop.f32.mrb[0].mxu0
      %765 = vmatprep.mubr.f32.mxu0 0.0
      %766 = vmatmul.mubr.f32.gmra.mrb[0].mxu0 %v666
      %v767 = vpop.f32.mrb[0].mxu0
      %v768 = vadd.f32 0.0, %v767
      %v769 = vpop.f32.mrb[0].mxu0
      %770 = vmatprep.mubr.f32.mxu0 0.0
      %771 = vmatmul.mubr.f32.gmra.mrb[0].mxu0 %v669
      %v772 = vpop.f32.mrb[0].mxu0
      %v773 = vadd.f32 0.0, %v772
      %v774 = vpop.f32.mrb[0].mxu0
      %775 = vdwg.mxu0
      %777 = vset.pattern.permute.xlu0 0
      %778 = vperm.xlu0 %777, %v738
      %v779 = vpop.permute.xlu0 %778
      %782 = vset.pattern.permute.xlu0 0
      %783 = vperm.xlu0 %782, %v743
      %v784 = vpop.permute.xlu0 %783
      %787 = vset.pattern.permute.xlu0 0
      %788 = vperm.xlu0 %787, %v748
      %v789 = vpop.permute.xlu0 %788
      %792 = vset.pattern.permute.xlu0 0
      %793 = vperm.xlu0 %792, %v753
      %v794 = vpop.permute.xlu0 %793
      %797 = vset.pattern.permute.xlu0 0
      %798 = vperm.xlu0 %797, %v758
      %v799 = vpop.permute.xlu0 %798
      %802 = vset.pattern.permute.xlu0 0
      %803 = vperm.xlu0 %802, %v763
      %v804 = vpop.permute.xlu0 %803
      %807 = vset.pattern.permute.xlu0 0
      %808 = vperm.xlu0 %807, %v768
      %v809 = vpop.permute.xlu0 %808
      %812 = vset.pattern.permute.xlu0 0
      %813 = vperm.xlu0 %812, %v773
      %v814 = vpop.permute.xlu0 %813
      %v816 = vsub.f32 %v533, %v779
      %v817 = vsub.f32 %v535, %v779
      %v818 = vsub.f32 %v539, %v784
      %v819 = vsub.f32 %v541, %v784
      %v820 = vsub.f32 %v545, %v789
      %v821 = vsub.f32 %v547, %v789
      %v822 = vsub.f32 %v551, %v794
      %v823 = vsub.f32 %v553, %v794
      %v824 = vsub.f32 %v557, %v799
      %v825 = vsub.f32 %v559, %v799
      %v826 = vsub.f32 %v563, %v804
      %v827 = vsub.f32 %v565, %v804
      %v828 = vsub.f32 %v569, %v809
      %v829 = vsub.f32 %v571, %v809
      %v830 = vsub.f32 %v575, %v814
      %v831 = vsub.f32 %v577, %v814
      %v832 = vmul.f32 %v816, %v816
      %v833 = vmul.f32 %v817, %v817
      %v834 = vmul.f32 %v818, %v818
      %v835 = vmul.f32 %v819, %v819
      %v836 = vmul.f32 %v820, %v820
      %v837 = vmul.f32 %v821, %v821
      %v838 = vmul.f32 %v822, %v822
      %v839 = vmul.f32 %v823, %v823
      %v840 = vmul.f32 %v824, %v824
      %v841 = vmul.f32 %v825, %v825
      %v842 = vmul.f32 %v826, %v826
      %v843 = vmul.f32 %v827, %v827
      %v844 = vmul.f32 %v828, %v828
      %v845 = vmul.f32 %v829, %v829
      %v846 = vmul.f32 %v830, %v830
      %v847 = vmul.f32 %v831, %v831
      %v848 = vadd.f32 %v832, %v833
      %849 = vadd.xlane.f32.xlu0 %v848
      %v850 = vpop.xlane.xlu0 %849
      %v851 = vadd.f32 %v834, %v835
      %852 = vadd.xlane.f32.xlu0 %v851
      %v853 = vpop.xlane.xlu0 %852
      %v854 = vadd.f32 %v836, %v837
      %855 = vadd.xlane.f32.xlu0 %v854
      %v856 = vpop.xlane.xlu0 %855
      %v857 = vadd.f32 %v838, %v839
      %858 = vadd.xlane.f32.xlu0 %v857
      %v859 = vpop.xlane.xlu0 %858
      %v860 = vadd.f32 %v840, %v841
      %861 = vadd.xlane.f32.xlu0 %v860
      %v862 = vpop.xlane.xlu0 %861
      %v863 = vadd.f32 %v842, %v843
      %864 = vadd.xlane.f32.xlu0 %v863
      %v865 = vpop.xlane.xlu0 %864
      %v866 = vadd.f32 %v844, %v845
      %867 = vadd.xlane.f32.xlu0 %v866
      %v868 = vpop.xlane.xlu0 %867
      %v869 = vadd.f32 %v846, %v847
      %870 = vadd.xlane.f32.xlu0 %v869
      %v871 = vpop.xlane.xlu0 %870
      %v872 = vmul.f32 %v850, %v637
      %v873 = vmul.f32 %v853, %v637
      %v874 = vmul.f32 %v856, %v637
      %v875 = vmul.f32 %v859, %v637
      %v876 = vmul.f32 %v862, %v637
      %v877 = vmul.f32 %v865, %v637
      %v878 = vmul.f32 %v868, %v637
      %v879 = vmul.f32 %v871, %v637
      %880 = vmatprep.subr.mxu0 0.0
      %881 = vmatpush1.msra.mxu0 %v872
      %882 = vmatprep.subr.mxu0 0.0
      %883 = vmatpush1.msra.mxu0 %v873
      %884 = vmatprep.subr.mxu0 0.0
      %885 = vmatpush1.msra.mxu0 %v874
      %886 = vmatprep.subr.mxu0 0.0
      %887 = vmatpush1.msra.mxu0 %v875
      %888 = vmatprep.subr.mxu0 0.0
      %889 = vmatpush1.msra.mxu0 %v876
      %890 = vmatprep.subr.mxu0 0.0
      %891 = vmatpush1.msra.mxu0 %v877
      %892 = vmatprep.subr.mxu0 0.0
      %893 = vmatpush1.msra.mxu0 %v878
      %894 = vmatprep.subr.mxu0 0.0
      %895 = vmatpush1.msra.mxu0 %v879
      %896 = vmatprep.subr.mxu0 0.0
      %897 = vmatpush1.msra.mxu0 0.0
      %898 = vmatprep.subr.mxu0 0.0
      %899 = vmatpush1.msra.mxu0 0.0
      %900 = vmatprep.subr.mxu0 0.0
      %901 = vmatpush1.msra.mxu0 0.0
      %902 = vmatprep.subr.mxu0 0.0
      %903 = vmatpush1.msra.mxu0 0.0
      %904 = vmatprep.subr.mxu0 0.0
      %905 = vmatpush1.msra.mxu0 0.0
      %906 = vmatprep.subr.mxu0 0.0
      %907 = vmatpush1.msra.mxu0 0.0
      %908 = vmatprep.subr.mxu0 0.0
      %909 = vmatpush1.msra.mxu0 0.0
      %910 = vmatprep.subr.mxu0 0.0
      %911 = vmatpush1.msra.mxu0 0.0
      %912 = vmatprep.subr.mxu0 0.0
      %913 = vmatpush1.msra.mxu0 0.0
      %914 = vmatprep.subr.mxu0 0.0
      %915 = vmatpush1.msra.mxu0 0.0
      %916 = vmatprep.subr.mxu0 0.0
      %917 = vmatpush1.msra.mxu0 0.0
      %918 = vmatprep.subr.mxu0 0.0
      %919 = vmatpush1.msra.mxu0 0.0
      %920 = vmatprep.subr.mxu0 0.0
      %921 = vmatpush1.msra.mxu0 0.0
      %922 = vmatprep.subr.mxu0 0.0
      %923 = vmatpush1.msra.mxu0 0.0
      %924 = vmatprep.subr.mxu0 0.0
      %925 = vmatpush1.msra.mxu0 0.0
      %926 = vmatprep.subr.mxu0 0.0
      %927 = vmatpush1.msra.mxu0 0.0
      %928 = vmatprep.subr.mxu0 0.0
      %929 = vmatpush1.msra.mxu0 0.0
      %930 = vmatprep.subr.mxu0 0.0
      %931 = vmatpush1.msra.mxu0 0.0
      %932 = vmatprep.subr.mxu0 0.0
      %933 = vmatpush1.msra.mxu0 0.0
      %934 = vmatprep.subr.mxu0 0.0
      %935 = vmatpush1.msra.mxu0 0.0
      %936 = vmatprep.subr.mxu0 0.0
      %937 = vmatpush1.msra.mxu0 0.0
      %938 = vmatprep.subr.mxu0 0.0
      %939 = vmatpush1.msra.mxu0 0.0
      %940 = vmatprep.subr.mxu0 0.0
      %941 = vmatpush1.msra.mxu0 0.0
      %942 = vmatprep.subr.mxu0 0.0
      %943 = vmatpush1.msra.mxu0 0.0
      %944 = vmatprep.mubr.f32.mxu0 0.0
      %945 = vmatmul.mubr.f32.gmra.mrb[0].mxu0 %v648
      %v946 = vpop.f32.mrb[0].mxu0
      %v947 = vadd.f32 0.0, %v946
      %v948 = vpop.f32.mrb[0].mxu0
      %949 = vmatprep.mubr.f32.mxu0 0.0
      %950 = vmatmul.mubr.f32.gmra.mrb[0].mxu0 %v651
      %v951 = vpop.f32.mrb[0].mxu0
      %v952 = vadd.f32 0.0, %v951
      %v953 = vpop.f32.mrb[0].mxu0
      %954 = vmatprep.mubr.f32.mxu0 0.0
      %955 = vmatmul.mubr.f32.gmra.mrb[0].mxu0 %v654
      %v956 = vpop.f32.mrb[0].mxu0
      %v957 = vadd.f32 0.0, %v956
      %v958 = vpop.f32.mrb[0].mxu0
      %959 = vmatprep.mubr.f32.mxu0 0.0
      %960 = vmatmul.mubr.f32.gmra.mrb[0].mxu0 %v657
      %v961 = vpop.f32.mrb[0].mxu0
      %v962 = vadd.f32 0.0, %v961
      %v963 = vpop.f32.mrb[0].mxu0
      %964 = vmatprep.mubr.f32.mxu0 0.0
      %965 = vmatmul.mubr.f32.gmra.mrb[0].mxu0 %v660
      %v966 = vpop.f32.mrb[0].mxu0
      %v967 = vadd.f32 0.0, %v966
      %v968 = vpop.f32.mrb[0].mxu0
      %969 = vmatprep.mubr.f32.mxu0 0.0
      %970 = vmatmul.mubr.f32.gmra.mrb[0].mxu0 %v663
      %v971 = vpop.f32.mrb[0].mxu0
      %v972 = vadd.f32 0.0, %v971
      %v973 = vpop.f32.mrb[0].mxu0
      %974 = vmatprep.mubr.f32.mxu0 0.0
      %975 = vmatmul.mubr.f32.gmra.mrb[0].mxu0 %v666
      %v976 = vpop.f32.mrb[0].mxu0
      %v977 = vadd.f32 0.0, %v976
      %v978 = vpop.f32.mrb[0].mxu0
      %979 = vmatprep.mubr.f32.mxu0 0.0
      %980 = vmatmul.mubr.f32.gmra.mrb[0].mxu0 %v669
      %v981 = vpop.f32.mrb[0].mxu0
      %v982 = vadd.f32 0.0, %v981
      %v983 = vpop.f32.mrb[0].mxu0
      %984 = vdwg.mxu0
      %v985 = vld [vmem:[%s3] sm:$0xff]
      %v986 = vld [vmem:[%s3 + $0x8] sm:$0xff]
      %v987 = vld [vmem:[%s3 + $0x10] sm:$0xff]
      %v988 = vld [vmem:[%s3 + $0x18] sm:$0xff]
      %v989 = vld [vmem:[%s3 + $0x20] sm:$0xff]
      %v990 = vld [vmem:[%s3 + $0x28] sm:$0xff]
      %v991 = vld [vmem:[%s3 + $0x30] sm:$0xff]
      %v992 = vld [vmem:[%s3 + $0x38] sm:$0xff]
      %v993 = vadd.f32 %v947, 1e-05
      %v994 = vadd.f32 %v952, 1e-05
      %v995 = vadd.f32 %v957, 1e-05
      %v996 = vadd.f32 %v962, 1e-05
      %v997 = vadd.f32 %v967, 1e-05
      %v998 = vadd.f32 %v972, 1e-05
      %v999 = vadd.f32 %v977, 1e-05
      %v1000 = vadd.f32 %v982, 1e-05
      %v1001 = vrsqrt.pop %v993
      %v1002 = vrsqrt.pop %v994
      %v1003 = vrsqrt.pop %v995
      %v1004 = vrsqrt.pop %v996
      %v1005 = vrsqrt.pop %v997
      %v1006 = vrsqrt.pop %v998
      %v1007 = vrsqrt.pop %v999
      %v1008 = vrsqrt.pop %v1000
      %v1009 = vmul.f32 %v985, %v1001
      %v1010 = vmul.f32 %v986, %v1002
      %v1011 = vmul.f32 %v987, %v1003
      %v1012 = vmul.f32 %v988, %v1004
      %v1013 = vmul.f32 %v989, %v1005
      %v1014 = vmul.f32 %v990, %v1006
      %v1015 = vmul.f32 %v991, %v1007
      %v1016 = vmul.f32 %v992, %v1008
      %v1017 = vld [vmem:[%s4] sm:$0xff]
      %v1018 = vld [vmem:[%s4 + $0x8] sm:$0xff]
      %v1019 = vld [vmem:[%s4 + $0x10] sm:$0xff]
      %v1020 = vld [vmem:[%s4 + $0x18] sm:$0xff]
      %v1021 = vld [vmem:[%s4 + $0x20] sm:$0xff]
      %v1022 = vld [vmem:[%s4 + $0x28] sm:$0xff]
      %v1023 = vld [vmem:[%s4 + $0x30] sm:$0xff]
      %v1024 = vld [vmem:[%s4 + $0x38] sm:$0xff]
      %v1025 = vmul.f32 %v738, %v1009
      %v1026 = vmul.f32 %v743, %v1010
      %v1027 = vmul.f32 %v748, %v1011
      %v1028 = vmul.f32 %v753, %v1012
      %v1029 = vmul.f32 %v758, %v1013
      %v1030 = vmul.f32 %v763, %v1014
      %v1031 = vmul.f32 %v768, %v1015
      %v1032 = vmul.f32 %v773, %v1016
      %v1033 = vsub.f32 %v1017, %v1025
      %v1034 = vsub.f32 %v1018, %v1026
      %v1035 = vsub.f32 %v1019, %v1027
      %v1036 = vsub.f32 %v1020, %v1028
      %v1037 = vsub.f32 %v1021, %v1029
      %v1038 = vsub.f32 %v1022, %v1030
      %v1039 = vsub.f32 %v1023, %v1031
      %v1040 = vsub.f32 %v1024, %v1032
      %1042 = vset.pattern.permute.xlu0 0
      %1043 = vperm.xlu0 %1042, %v1009
      %v1044 = vpop.permute.xlu0 %1043
      %1047 = vset.pattern.permute.xlu0 0
      %1048 = vperm.xlu0 %1047, %v1010
      %v1049 = vpop.permute.xlu0 %1048
      %1052 = vset.pattern.permute.xlu0 0
      %1053 = vperm.xlu0 %1052, %v1011
      %v1054 = vpop.permute.xlu0 %1053
      %1057 = vset.pattern.permute.xlu0 0
      %1058 = vperm.xlu0 %1057, %v1012
      %v1059 = vpop.permute.xlu0 %1058
      %1062 = vset.pattern.permute.xlu0 0
      %1063 = vperm.xlu0 %1062, %v1013
      %v1064 = vpop.permute.xlu0 %1063
      %1067 = vset.pattern.permute.xlu0 0
      %1068 = vperm.xlu0 %1067, %v1014
      %v1069 = vpop.permute.xlu0 %1068
      %1072 = vset.pattern.permute.xlu0 0
      %1073 = vperm.xlu0 %1072, %v1015
      %v1074 = vpop.permute.xlu0 %1073
      %1077 = vset.pattern.permute.xlu0 0
      %1078 = vperm.xlu0 %1077, %v1016
      %v1079 = vpop.permute.xlu0 %1078
      %v1081 = vmul.f32 %v533, %v1044
      %v1082 = vmul.f32 %v535, %v1044
      %v1083 = vmul.f32 %v539, %v1049
      %v1084 = vmul.f32 %v541, %v1049
      %v1085 = vmul.f32 %v545, %v1054
      %v1086 = vmul.f32 %v547, %v1054
      %v1087 = vmul.f32 %v551, %v1059
      %v1088 = vmul.f32 %v553, %v1059
      %v1089 = vmul.f32 %v557, %v1064
      %v1090 = vmul.f32 %v559, %v1064
      %v1091 = vmul.f32 %v563, %v1069
      %v1092 = vmul.f32 %v565, %v1069
      %v1093 = vmul.f32 %v569, %v1074
      %v1094 = vmul.f32 %v571, %v1074
      %v1095 = vmul.f32 %v575, %v1079
      %v1096 = vmul.f32 %v577, %v1079
      %1098 = vset.pattern.permute.xlu0 0
      %1099 = vperm.xlu0 %1098, %v1033
      %v1100 = vpop.permute.xlu0 %1099
      %1103 = vset.pattern.permute.xlu0 0
      %1104 = vperm.xlu0 %1103, %v1034
      %v1105 = vpop.permute.xlu0 %1104
      %1108 = vset.pattern.permute.xlu0 0
      %1109 = vperm.xlu0 %1108, %v1035
      %v1110 = vpop.permute.xlu0 %1109
      %1113 = vset.pattern.permute.xlu0 0
      %1114 = vperm.xlu0 %1113, %v1036
      %v1115 = vpop.permute.xlu0 %1114
      %1118 = vset.pattern.permute.xlu0 0
      %1119 = vperm.xlu0 %1118, %v1037
      %v1120 = vpop.permute.xlu0 %1119
      %1123 = vset.pattern.permute.xlu0 0
      %1124 = vperm.xlu0 %1123, %v1038
      %v1125 = vpop.permute.xlu0 %1124
      %1128 = vset.pattern.permute.xlu0 0
      %1129 = vperm.xlu0 %1128, %v1039
      %v1130 = vpop.permute.xlu0 %1129
      %1133 = vset.pattern.permute.xlu0 0
      %1134 = vperm.xlu0 %1133, %v1040
      %v1135 = vpop.permute.xlu0 %1134
      %v1137 = vadd.f32 %v1081, %v1100
      %v1138 = vadd.f32 %v1082, %v1100
      %v1139 = vadd.f32 %v1083, %v1105
      %v1140 = vadd.f32 %v1084, %v1105
      %v1141 = vadd.f32 %v1085, %v1110
      %v1142 = vadd.f32 %v1086, %v1110
      %v1143 = vadd.f32 %v1087, %v1115
      %v1144 = vadd.f32 %v1088, %v1115
      %v1145 = vadd.f32 %v1089, %v1120
      %v1146 = vadd.f32 %v1090, %v1120
      %v1147 = vadd.f32 %v1091, %v1125
      %v1148 = vadd.f32 %v1092, %v1125
      %v1149 = vadd.f32 %v1093, %v1130
      %v1150 = vadd.f32 %v1094, %v1130
      %v1151 = vadd.f32 %v1095, %v1135
      %v1152 = vadd.f32 %v1096, %v1135
      %v1153 = vmax.f32 %v1137, 0.0
      %v1154 = vmax.f32 %v1138, 0.0
      %v1155 = vmax.f32 %v1139, 0.0
      %v1156 = vmax.f32 %v1140, 0.0
      %v1157 = vmax.f32 %v1141, 0.0
      %v1158 = vmax.f32 %v1142, 0.0
      %v1159 = vmax.f32 %v1143, 0.0
      %v1160 = vmax.f32 %v1144, 0.0
      %v1161 = vmax.f32 %v1145, 0.0
      %v1162 = vmax.f32 %v1146, 0.0
      %v1163 = vmax.f32 %v1147, 0.0
      %v1164 = vmax.f32 %v1148, 0.0
      %v1165 = vmax.f32 %v1149, 0.0
      %v1166 = vmax.f32 %v1150, 0.0
      %v1167 = vmax.f32 %v1151, 0.0
      %v1168 = vmax.f32 %v1152, 0.0
      %1169 = vst [vmem:[%s224] sm:$0xff] %v1153
      %1170 = vst [vmem:[%s224 + $0x8] sm:$0xff] %v1154
      %1171 = vst [vmem:[%s224 + $0x10] sm:$0xff] %v1155
      %1172 = vst [vmem:[%s224 + $0x18] sm:$0xff] %v1156
      %1173 = vst [vmem:[%s224 + $0x20] sm:$0xff] %v1157
      %1174 = vst [vmem:[%s224 + $0x28] sm:$0xff] %v1158
      %1175 = vst [vmem:[%s224 + $0x30] sm:$0xff] %v1159
      %1176 = vst [vmem:[%s224 + $0x38] sm:$0xff] %v1160
      %1177 = vst [vmem:[%s224 + $0x40] sm:$0xff] %v1161
      %1178 = vst [vmem:[%s224 + $0x48] sm:$0xff] %v1162
      %1179 = vst [vmem:[%s224 + $0x50] sm:$0xff] %v1163
      %1180 = vst [vmem:[%s224 + $0x58] sm:$0xff] %v1164
      %1181 = vst [vmem:[%s224 + $0x60] sm:$0xff] %v1165
      %1182 = vst [vmem:[%s224 + $0x68] sm:$0xff] %v1166
      %1183 = vst [vmem:[%s224 + $0x70] sm:$0xff] %v1167
      %1184 = vst [vmem:[%s224 + $0x78] sm:$0xff] %v1168
      %p1185 = scmp.lt.s32.totalorder %s16, 1
      %s1186 = scalar_select %p1185, %s16, 1
      %s1187 = smul.addr %s1186, 16
      %s1188 = smul.addr %s1187, 8
      %s1189 = scalar_lea.vmem %s5, %s1188
      // Predicated region
      $region41: #{cgr_forward.1} parent=39 // pred_check
        %p1190 = pneg %p144
      $region42: #{cgr_forward.1} parent=39 // pred_check_branch
        %1192 = sbr.rel (%p1190) target = $region44
      $region43: #{cgr_forward.1} parent=39 // pred_region
        _
      $region44: #{cgr_forward.1} parent=39 // pred_fallthru
        _
    $region40: #{cgr_forward.1} parent=5 // pred_fallthru
      _
    %p1193 = scmp.le.s32.totalorder 2, %s11
    // Predicated region
    $region45: #{cgr_forward.1} parent=5 // pred_check
      %p1194 = pneg %p1193
    $region46: #{cgr_forward.1} parent=5 // pred_check_branch
      %1196 = sbr.rel (%p1194) target = $region48
    $region47: #{cgr_forward.1} parent=5 // pred_region
      %s1197 = ssub.s32 %s11, 2
      // Predicated region
      $region49: #{cgr_forward.1} parent=47 // pred_check
        %p1198 = pneg %p150
      $region50: #{cgr_forward.1} parent=47 // pred_check_branch
        %1200 = sbr.rel (%p1198) target = $region52
      $region51: #{cgr_forward.1} parent=47 // pred_region
        %p1201 = scmp.lt.s32.totalorder %s17, 1
        %s1202 = scalar_select %p1201, %s17, 1
        %s1203 = smul.addr %s1202, 16
        %s1204 = smul.addr %s1203, 8
        %s1205 = scalar_lea.vmem %s5, %s1204
      $region52: #{cgr_forward.1} parent=47 // pred_fallthru
        _
    $region48: #{cgr_forward.1} parent=5 // pred_fallthru
      _
  $region6: #{cgr_forward.1} parent=0 // loop_footer
    %s15 = sadd.s32 1, %s11
  $region7: #{cgr_forward.1} parent=0 // loop_footer_branch
    %10 = sbr.rel target = $region3
  $region8: #{cgr_forward.1} parent=0 // loop_exit
    _

</llo_original>
